<compile_context>
chip_gen: v7x
topology: tpu7x:2x2x1
jax: 0.10.0
libtpu: 0.0.40
codegen_flags: <defaults>
</compile_context>

<pallas_src>
import functools

import jax
import jax.numpy as jnp
from jax.experimental import pallas as pl
from jax.experimental.pallas import tpu as pltpu


def _make_recurrence_kernel(S, TB):
    """Kernel over one (batch_block, time_block) tile of the recurrence."""
    full_blocks = (S % TB) == 0

    def kernel(p_ref, whh_ref, hs_ref, h_scr):
        # p_ref  : (TB, BB, H) f32   precomputed X @ W_ih^T + (b_ih + b_hh), time-major
        # whh_ref: (H, H)      bf16  W_hh^T (constant index_map -> stays resident)
        # hs_ref : (TB, BB, H) bf16  hidden states for this tile (output)
        # h_scr  : (BB, H)     f32   carried hidden state (persists across time blocks)
        tb = pl.program_id(1)

        @pl.when(tb == 0)
        def _init():
            h_scr[...] = jnp.zeros_like(h_scr)

        whh = whh_ref[...]  # hoist weight load out of the serial loop

        def step(t, h):
            h_new = jnp.tanh(
                p_ref[t]
                + jnp.dot(h.astype(jnp.bfloat16), whh,
                          preferred_element_type=jnp.float32)
            )
            hs_ref[t] = h_new.astype(hs_ref.dtype)
            return h_new

        if full_blocks:
            # Static trip count -> unroll short loops for LLO scheduler visibility.
            h_last = jax.lax.fori_loop(0, TB, step, h_scr[...], unroll=(TB <= 32))
        else:
            # Ragged last time block: only run the valid steps.
            steps = jnp.minimum(TB, S - tb * TB)
            h_last = jax.lax.fori_loop(0, steps, step, h_scr[...])

        h_scr[...] = h_last

    return kernel


def attention_rnn_decoder(x_bsf, w_ih, w_hh, b_ih, b_hh, w_fc, b_fc,
                          *, time_block=128):
    """x_bsf: (B, S, input_size), batch-first like the PyTorch module.

    PyTorch-shaped weights:
      w_ih: (H, I), w_hh: (H, H), b_ih/b_hh: (H,), w_fc: (O, H), b_fc: (O,)
    Returns (B, S, output_size) in float32.
    """
    B, S, I = x_bsf.shape
    H = w_hh.shape[0]
    O = w_fc.shape[0]

    # bf16 operands for the MXU, f32 accumulation everywhere.
    x_bf = x_bsf.astype(jnp.bfloat16)
    wih_t = jnp.transpose(w_ih).astype(jnp.bfloat16)   # (I, H)
    whh_t = jnp.transpose(w_hh).astype(jnp.bfloat16)   # (H, H)
    wfc_t = jnp.transpose(w_fc).astype(jnp.bfloat16)   # (H, O)
    b_comb = (b_ih + b_hh).astype(jnp.float32)          # (H,)
    bfc = b_fc.astype(jnp.float32)                      # (O,)

    # Non-recurrent input projection, hoisted off the serial path:
    # one (B*S, I) @ (I, H) matmul; XLA fuses the time-major transpose.
    p_bsh = jnp.dot(x_bf, wih_t, preferred_element_type=jnp.float32) + b_comb
    p_sbh = jnp.transpose(p_bsh, (1, 0, 2))              # (S, B, H) f32

    # Tiling: block of TB time steps per grid step, batch split only when it
    # keeps the second-minor block dim 8-aligned (or full).
    TB = min(S, time_block)
    BB = B if B <= 8 else 8
    if B % BB != 0:
        BB = B
    grid = (pl.cdiv(B, BB), pl.cdiv(S, TB))

    kernel = _make_recurrence_kernel(S, TB)

    hs_sbh = pl.pallas_call(
        kernel,
        out_shape=jax.ShapeDtypeStruct((S, B, H), jnp.bfloat16),
        grid_spec=pltpu.PrefetchScalarGridSpec(
            num_scalar_prefetch=0,
            grid=grid,
            in_specs=[
                pl.BlockSpec((TB, BB, H), lambda b, t: (t, b, 0)),  # P block
                # Constant index_map: weight fetched once and kept resident.
                # (On v7x with large H, single-buffer it via
                #  pipeline_mode=pl.Buffered(1) and set vmem_limit_bytes.)
                pl.BlockSpec((H, H), lambda b, t: (0, 0)),           # W_hh^T
            ],
            out_specs=pl.BlockSpec((TB, BB, H), lambda b, t: (t, b, 0)),
            scratch_shapes=[pltpu.VMEM((BB, H), jnp.float32)],       # carried h
        ),
        compiler_params=pltpu.CompilerParams(
            # Time recurrence must stay sequential ("arbitrary"); batch blocks
            # are independent and may be sharded across cores ("parallel").
            dimension_semantics=("parallel", "arbitrary"),
        ),
    )(p_sbh, whh_t)

    # Output projection off the serial path: one (S*B, H) @ (H, O) matmul,
    # fused by XLA with the transpose back to batch-first.
    out_sbo = jnp.dot(hs_sbh, wfc_t, preferred_element_type=jnp.float32) + bfc
    return jnp.transpose(out_sbo, (1, 0, 2))             # (B, S, O) f32


def reference_rnn_decoder(x_bsf, w_ih, w_hh, b_ih, b_hh, w_fc, b_fc):
    """Pure-JAX f32 reference (mirrors PyTorch nn.RNN(tanh) + nn.Linear)."""
    B, S, I = x_bsf.shape
    H = w_hh.shape[0]

    def step(h, x_t):
        h_new = jnp.tanh(x_t @ w_ih.T + b_ih + h @ w_hh.T + b_hh)
        return h_new, h_new

    x_sbf = jnp.transpose(x_bsf, (1, 0, 2))
    _, hs = jax.lax.scan(step, jnp.zeros((B, H), jnp.float32), x_sbf)
    out = hs @ w_fc.T + b_fc
    return jnp.transpose(out, (1, 0, 2))


if __name__ == "__main__":
    # Shapes implied by the module: input_size = embedding_size = 16,
    # output_size = len(vocab) = 20, hidden_size = 32.
    batch, seq = 2, 8
    input_size, hidden_size, output_size = 16, 32, 20

    key = jax.random.PRNGKey(0)
    keys = jax.random.split(key, 8)

    k_rnn = 1.0 / jnp.sqrt(hidden_size)
    k_fc = 1.0 / jnp.sqrt(hidden_size)

    x = jax.random.normal(keys[0], (batch, seq, input_size), jnp.float32)
    w_ih = jax.random.uniform(keys[1], (hidden_size, input_size), jnp.float32, -k_rnn, k_rnn)
    w_hh = jax.random.uniform(keys[2], (hidden_size, hidden_size), jnp.float32, -k_rnn, k_rnn)
    b_ih = jax.random.uniform(keys[3], (hidden_size,), jnp.float32, -k_rnn, k_rnn)
    b_hh = jax.random.uniform(keys[4], (hidden_size,), jnp.float32, -k_rnn, k_rnn)
    w_fc = jax.random.uniform(keys[5], (output_size, hidden_size), jnp.float32, -k_fc, k_fc)
    b_fc = jax.random.uniform(keys[6], (output_size,), jnp.float32, -k_fc, k_fc)

    run = jax.jit(attention_rnn_decoder)
    out = jax.block_until_ready(run(x, w_ih, w_hh, b_ih, b_hh, w_fc, b_fc))

    ref = reference_rnn_decoder(x, w_ih, w_hh, b_ih, b_hh, w_fc, b_fc)
    assert out.shape == (batch, seq, output_size)
    # bf16 MXU operands (per perf review) -> relaxed tolerance vs f32 reference.
    assert jnp.allclose(out, ref, atol=2e-2, rtol=2e-2), "mismatch vs reference"

    print("KERNEL_OK")
</pallas_src>

<mosaic_0001>
module attributes {stable_mosaic.version = 11 : i64} {
  func.func @kernel(%arg0: i32, %arg1: i32, %arg2: memref<8x2x32xf32, #tpu.memory_space<vmem>>, %arg3: memref<32x32xbf16, #tpu.memory_space<vmem>>, %arg4: memref<8x2x32xbf16, #tpu.memory_space<vmem>>, %arg5: memref<2x32xf32, #tpu.memory_space<vmem>>) attributes {dimension_semantics = [#tpu.dimension_semantics<parallel>, #tpu.dimension_semantics<arbitrary>], iteration_bounds = array<i64: 1, 1>, scalar_prefetch = 0 : i64, scratch_operands = 1 : i64, tpu.core_type = #tpu.core_type<tc>, window_params = [{transform_indices = @transform_0, window_bounds = array<i64: 8, 2, 32>}, {pipeline_mode = #tpu.pipeline_mode<synchronous>, transform_indices = @transform_1, window_bounds = array<i64: 32, 32>}, {transform_indices = @transform_2, window_bounds = array<i64: 8, 2, 32>}]} {
    %c0_i32 = arith.constant 0 : i32
    %0 = arith.cmpi eq, %arg1, %c0_i32 : i32
    %1 = arith.extui %0 : i1 to i32
    %c0_i32_0 = arith.constant 0 : i32
    %2 = arith.cmpi ne, %1, %c0_i32_0 : i32
    scf.if %2 {
      %cst_46 = arith.constant 0.000000e+00 : f32
      %102 = vector.broadcast %cst_46 : f32 to vector<2x32xf32>
      %c0_47 = arith.constant 0 : index
      %c0_48 = arith.constant 0 : index
      %103 = vector.load %arg5[%c0_47, %c0_48] : memref<2x32xf32, #tpu.memory_space<vmem>>, vector<2x32xf32>
      tpu.vector_store %arg5[%c0_47, %c0_48], %102 {strides = array<i32>} : memref<2x32xf32, #tpu.memory_space<vmem>>, vector<2x32xf32>,
    } else {
    }
    %c0 = arith.constant 0 : index
    %c0_1 = arith.constant 0 : index
    %3 = vector.load %arg3[%c0, %c0_1] : memref<32x32xbf16, #tpu.memory_space<vmem>>, vector<32x32xbf16>
    %c0_2 = arith.constant 0 : index
    %c0_3 = arith.constant 0 : index
    %4 = vector.load %arg5[%c0_2, %c0_3] : memref<2x32xf32, #tpu.memory_space<vmem>>, vector<2x32xf32>
    %c0_i32_4 = arith.constant 0 : i32
    %5 = arith.index_cast %c0_i32_4 : i32 to index
    %c0_5 = arith.constant 0 : index
    %c0_6 = arith.constant 0 : index
    %6 = vector.load %arg2[%5, %c0_5, %c0_6] : memref<8x2x32xf32, #tpu.memory_space<vmem>>, vector<1x2x32xf32>
    %7 = vector.shape_cast %6 : vector<1x2x32xf32> to vector<2x32xf32>
    %8 = arith.truncf %4 : vector<2x32xf32> to vector<2x32xbf16>
    %cst = arith.constant dense<0.000000e+00> : vector<2x32xf32>
    %9 = tpu.matmul %8, %3, %cst {dimension_numbers = #tpu.dot_dimension_numbers<[1], [0], [0], [1], [0, 0, 1, 1], [], []>} : vector<2x32xbf16>, vector<32x32xbf16>, vector<2x32xf32> -> vector<2x32xf32>
    %10 = arith.addf %7, %9 : vector<2x32xf32>
    %11 = math.tanh %10 : vector<2x32xf32>
    %12 = arith.truncf %11 : vector<2x32xf32> to vector<2x32xbf16>
    %13 = arith.index_cast %c0_i32_4 : i32 to index
    %c0_7 = arith.constant 0 : index
    %c0_8 = arith.constant 0 : index
    %14 = vector.load %arg4[%13, %c0_7, %c0_8] : memref<8x2x32xbf16, #tpu.memory_space<vmem>>, vector<1x2x32xbf16>
    %15 = vector.shape_cast %14 : vector<1x2x32xbf16> to vector<2x32xbf16>
    %16 = vector.shape_cast %12 : vector<2x32xbf16> to vector<1x2x32xbf16>
    tpu.vector_store %arg4[%13, %c0_7, %c0_8], %16 {strides = array<i32>} : memref<8x2x32xbf16, #tpu.memory_space<vmem>>, vector<1x2x32xbf16>,
    %c1_i32 = arith.constant 1 : i32
    %17 = arith.index_cast %c1_i32 : i32 to index
    %c0_9 = arith.constant 0 : index
    %c0_10 = arith.constant 0 : index
    %18 = vector.load %arg2[%17, %c0_9, %c0_10] : memref<8x2x32xf32, #tpu.memory_space<vmem>>, vector<1x2x32xf32>
    %19 = vector.shape_cast %18 : vector<1x2x32xf32> to vector<2x32xf32>
    %20 = arith.truncf %11 : vector<2x32xf32> to vector<2x32xbf16>
    %cst_11 = arith.constant dense<0.000000e+00> : vector<2x32xf32>
    %21 = tpu.matmul %20, %3, %cst_11 {dimension_numbers = #tpu.dot_dimension_numbers<[1], [0], [0], [1], [0, 0, 1, 1], [], []>} : vector<2x32xbf16>, vector<32x32xbf16>, vector<2x32xf32> -> vector<2x32xf32>
    %22 = arith.addf %19, %21 : vector<2x32xf32>
    %23 = math.tanh %22 : vector<2x32xf32>
    %24 = arith.truncf %23 : vector<2x32xf32> to vector<2x32xbf16>
    %25 = arith.index_cast %c1_i32 : i32 to index
    %c0_12 = arith.constant 0 : index
    %c0_13 = arith.constant 0 : index
    %26 = vector.load %arg4[%25, %c0_12, %c0_13] : memref<8x2x32xbf16, #tpu.memory_space<vmem>>, vector<1x2x32xbf16>
    %27 = vector.shape_cast %26 : vector<1x2x32xbf16> to vector<2x32xbf16>
    %28 = vector.shape_cast %24 : vector<2x32xbf16> to vector<1x2x32xbf16>
    tpu.vector_store %arg4[%25, %c0_12, %c0_13], %28 {strides = array<i32>} : memref<8x2x32xbf16, #tpu.memory_space<vmem>>, vector<1x2x32xbf16>,
    %c2_i32 = arith.constant 2 : i32
    %29 = arith.index_cast %c2_i32 : i32 to index
    %c0_14 = arith.constant 0 : index
    %c0_15 = arith.constant 0 : index
    %30 = vector.load %arg2[%29, %c0_14, %c0_15] : memref<8x2x32xf32, #tpu.memory_space<vmem>>, vector<1x2x32xf32>
    %31 = vector.shape_cast %30 : vector<1x2x32xf32> to vector<2x32xf32>
    %32 = arith.truncf %23 : vector<2x32xf32> to vector<2x32xbf16>
    %cst_16 = arith.constant dense<0.000000e+00> : vector<2x32xf32>
    %33 = tpu.matmul %32, %3, %cst_16 {dimension_numbers = #tpu.dot_dimension_numbers<[1], [0], [0], [1], [0, 0, 1, 1], [], []>} : vector<2x32xbf16>, vector<32x32xbf16>, vector<2x32xf32> -> vector<2x32xf32>
    %34 = arith.addf %31, %33 : vector<2x32xf32>
    %35 = math.tanh %34 : vector<2x32xf32>
    %36 = arith.truncf %35 : vector<2x32xf32> to vector<2x32xbf16>
    %37 = arith.index_cast %c2_i32 : i32 to index
    %c0_17 = arith.constant 0 : index
    %c0_18 = arith.constant 0 : index
    %38 = vector.load %arg4[%37, %c0_17, %c0_18] : memref<8x2x32xbf16, #tpu.memory_space<vmem>>, vector<1x2x32xbf16>
    %39 = vector.shape_cast %38 : vector<1x2x32xbf16> to vector<2x32xbf16>
    %40 = vector.shape_cast %36 : vector<2x32xbf16> to vector<1x2x32xbf16>
    tpu.vector_store %arg4[%37, %c0_17, %c0_18], %40 {strides = array<i32>} : memref<8x2x32xbf16, #tpu.memory_space<vmem>>, vector<1x2x32xbf16>,
    %c3_i32 = arith.constant 3 : i32
    %41 = arith.index_cast %c3_i32 : i32 to index
    %c0_19 = arith.constant 0 : index
    %c0_20 = arith.constant 0 : index
    %42 = vector.load %arg2[%41, %c0_19, %c0_20] : memref<8x2x32xf32, #tpu.memory_space<vmem>>, vector<1x2x32xf32>
    %43 = vector.shape_cast %42 : vector<1x2x32xf32> to vector<2x32xf32>
    %44 = arith.truncf %35 : vector<2x32xf32> to vector<2x32xbf16>
    %cst_21 = arith.constant dense<0.000000e+00> : vector<2x32xf32>
    %45 = tpu.matmul %44, %3, %cst_21 {dimension_numbers = #tpu.dot_dimension_numbers<[1], [0], [0], [1], [0, 0, 1, 1], [], []>} : vector<2x32xbf16>, vector<32x32xbf16>, vector<2x32xf32> -> vector<2x32xf32>
    %46 = arith.addf %43, %45 : vector<2x32xf32>
    %47 = math.tanh %46 : vector<2x32xf32>
    %48 = arith.truncf %47 : vector<2x32xf32> to vector<2x32xbf16>
    %49 = arith.index_cast %c3_i32 : i32 to index
    %c0_22 = arith.constant 0 : index
    %c0_23 = arith.constant 0 : index
    %50 = vector.load %arg4[%49, %c0_22, %c0_23] : memref<8x2x32xbf16, #tpu.memory_space<vmem>>, vector<1x2x32xbf16>
    %51 = vector.shape_cast %50 : vector<1x2x32xbf16> to vector<2x32xbf16>
    %52 = vector.shape_cast %48 : vector<2x32xbf16> to vector<1x2x32xbf16>
    tpu.vector_store %arg4[%49, %c0_22, %c0_23], %52 {strides = array<i32>} : memref<8x2x32xbf16, #tpu.memory_space<vmem>>, vector<1x2x32xbf16>,
    %c4_i32 = arith.constant 4 : i32
    %53 = arith.index_cast %c4_i32 : i32 to index
    %c0_24 = arith.constant 0 : index
    %c0_25 = arith.constant 0 : index
    %54 = vector.load %arg2[%53, %c0_24, %c0_25] : memref<8x2x32xf32, #tpu.memory_space<vmem>>, vector<1x2x32xf32>
    %55 = vector.shape_cast %54 : vector<1x2x32xf32> to vector<2x32xf32>
    %56 = arith.truncf %47 : vector<2x32xf32> to vector<2x32xbf16>
    %cst_26 = arith.constant dense<0.000000e+00> : vector<2x32xf32>
    %57 = tpu.matmul %56, %3, %cst_26 {dimension_numbers = #tpu.dot_dimension_numbers<[1], [0], [0], [1], [0, 0, 1, 1], [], []>} : vector<2x32xbf16>, vector<32x32xbf16>, vector<2x32xf32> -> vector<2x32xf32>
    %58 = arith.addf %55, %57 : vector<2x32xf32>
    %59 = math.tanh %58 : vector<2x32xf32>
    %60 = arith.truncf %59 : vector<2x32xf32> to vector<2x32xbf16>
    %61 = arith.index_cast %c4_i32 : i32 to index
    %c0_27 = arith.constant 0 : index
    %c0_28 = arith.constant 0 : index
    %62 = vector.load %arg4[%61, %c0_27, %c0_28] : memref<8x2x32xbf16, #tpu.memory_space<vmem>>, vector<1x2x32xbf16>
    %63 = vector.shape_cast %62 : vector<1x2x32xbf16> to vector<2x32xbf16>
    %64 = vector.shape_cast %60 : vector<2x32xbf16> to vector<1x2x32xbf16>
    tpu.vector_store %arg4[%61, %c0_27, %c0_28], %64 {strides = array<i32>} : memref<8x2x32xbf16, #tpu.memory_space<vmem>>, vector<1x2x32xbf16>,
    %c5_i32 = arith.constant 5 : i32
    %65 = arith.index_cast %c5_i32 : i32 to index
    %c0_29 = arith.constant 0 : index
    %c0_30 = arith.constant 0 : index
    %66 = vector.load %arg2[%65, %c0_29, %c0_30] : memref<8x2x32xf32, #tpu.memory_space<vmem>>, vector<1x2x32xf32>
    %67 = vector.shape_cast %66 : vector<1x2x32xf32> to vector<2x32xf32>
    %68 = arith.truncf %59 : vector<2x32xf32> to vector<2x32xbf16>
    %cst_31 = arith.constant dense<0.000000e+00> : vector<2x32xf32>
    %69 = tpu.matmul %68, %3, %cst_31 {dimension_numbers = #tpu.dot_dimension_numbers<[1], [0], [0], [1], [0, 0, 1, 1], [], []>} : vector<2x32xbf16>, vector<32x32xbf16>, vector<2x32xf32> -> vector<2x32xf32>
    %70 = arith.addf %67, %69 : vector<2x32xf32>
    %71 = math.tanh %70 : vector<2x32xf32>
    %72 = arith.truncf %71 : vector<2x32xf32> to vector<2x32xbf16>
    %73 = arith.index_cast %c5_i32 : i32 to index
    %c0_32 = arith.constant 0 : index
    %c0_33 = arith.constant 0 : index
    %74 = vector.load %arg4[%73, %c0_32, %c0_33] : memref<8x2x32xbf16, #tpu.memory_space<vmem>>, vector<1x2x32xbf16>
    %75 = vector.shape_cast %74 : vector<1x2x32xbf16> to vector<2x32xbf16>
    %76 = vector.shape_cast %72 : vector<2x32xbf16> to vector<1x2x32xbf16>
    tpu.vector_store %arg4[%73, %c0_32, %c0_33], %76 {strides = array<i32>} : memref<8x2x32xbf16, #tpu.memory_space<vmem>>, vector<1x2x32xbf16>,
    %c6_i32 = arith.constant 6 : i32
    %77 = arith.index_cast %c6_i32 : i32 to index
    %c0_34 = arith.constant 0 : index
    %c0_35 = arith.constant 0 : index
    %78 = vector.load %arg2[%77, %c0_34, %c0_35] : memref<8x2x32xf32, #tpu.memory_space<vmem>>, vector<1x2x32xf32>
    %79 = vector.shape_cast %78 : vector<1x2x32xf32> to vector<2x32xf32>
    %80 = arith.truncf %71 : vector<2x32xf32> to vector<2x32xbf16>
    %cst_36 = arith.constant dense<0.000000e+00> : vector<2x32xf32>
    %81 = tpu.matmul %80, %3, %cst_36 {dimension_numbers = #tpu.dot_dimension_numbers<[1], [0], [0], [1], [0, 0, 1, 1], [], []>} : vector<2x32xbf16>, vector<32x32xbf16>, vector<2x32xf32> -> vector<2x32xf32>
    %82 = arith.addf %79, %81 : vector<2x32xf32>
    %83 = math.tanh %82 : vector<2x32xf32>
    %84 = arith.truncf %83 : vector<2x32xf32> to vector<2x32xbf16>
    %85 = arith.index_cast %c6_i32 : i32 to index
    %c0_37 = arith.constant 0 : index
    %c0_38 = arith.constant 0 : index
    %86 = vector.load %arg4[%85, %c0_37, %c0_38] : memref<8x2x32xbf16, #tpu.memory_space<vmem>>, vector<1x2x32xbf16>
    %87 = vector.shape_cast %86 : vector<1x2x32xbf16> to vector<2x32xbf16>
    %88 = vector.shape_cast %84 : vector<2x32xbf16> to vector<1x2x32xbf16>
    tpu.vector_store %arg4[%85, %c0_37, %c0_38], %88 {strides = array<i32>} : memref<8x2x32xbf16, #tpu.memory_space<vmem>>, vector<1x2x32xbf16>,
    %c7_i32 = arith.constant 7 : i32
    %89 = arith.index_cast %c7_i32 : i32 to index
    %c0_39 = arith.constant 0 : index
    %c0_40 = arith.constant 0 : index
    %90 = vector.load %arg2[%89, %c0_39, %c0_40] : memref<8x2x32xf32, #tpu.memory_space<vmem>>, vector<1x2x32xf32>
    %91 = vector.shape_cast %90 : vector<1x2x32xf32> to vector<2x32xf32>
    %92 = arith.truncf %83 : vector<2x32xf32> to vector<2x32xbf16>
    %cst_41 = arith.constant dense<0.000000e+00> : vector<2x32xf32>
    %93 = tpu.matmul %92, %3, %cst_41 {dimension_numbers = #tpu.dot_dimension_numbers<[1], [0], [0], [1], [0, 0, 1, 1], [], []>} : vector<2x32xbf16>, vector<32x32xbf16>, vector<2x32xf32> -> vector<2x32xf32>
    %94 = arith.addf %91, %93 : vector<2x32xf32>
    %95 = math.tanh %94 : vector<2x32xf32>
    %96 = arith.truncf %95 : vector<2x32xf32> to vector<2x32xbf16>
    %97 = arith.index_cast %c7_i32 : i32 to index
    %c0_42 = arith.constant 0 : index
    %c0_43 = arith.constant 0 : index
    %98 = vector.load %arg4[%97, %c0_42, %c0_43] : memref<8x2x32xbf16, #tpu.memory_space<vmem>>, vector<1x2x32xbf16>
    %99 = vector.shape_cast %98 : vector<1x2x32xbf16> to vector<2x32xbf16>
    %100 = vector.shape_cast %96 : vector<2x32xbf16> to vector<1x2x32xbf16>
    tpu.vector_store %arg4[%97, %c0_42, %c0_43], %100 {strides = array<i32>} : memref<8x2x32xbf16, #tpu.memory_space<vmem>>, vector<1x2x32xbf16>,
    %c8_i32 = arith.constant 8 : i32
    %c0_44 = arith.constant 0 : index
    %c0_45 = arith.constant 0 : index
    %101 = vector.load %arg5[%c0_44, %c0_45] : memref<2x32xf32, #tpu.memory_space<vmem>>, vector<2x32xf32>
    tpu.vector_store %arg5[%c0_44, %c0_45], %95 {strides = array<i32>} : memref<2x32xf32, #tpu.memory_space<vmem>>, vector<2x32xf32>,
    return
  }
  func.func @transform_0(%arg0: i32, %arg1: i32) -> (i32, i32, i32) {
    %c0_i32 = arith.constant 0 : i32
    %c0_i32_0 = arith.constant 0 : i32
    return %arg1, %arg0, %c0_i32 : i32, i32, i32
  }
  func.func @transform_1(%arg0: i32, %arg1: i32) -> (i32, i32) {
    %c0_i32 = arith.constant 0 : i32
    %c0_i32_0 = arith.constant 0 : i32
    %c0_i32_1 = arith.constant 0 : i32
    return %c0_i32, %c0_i32_0 : i32, i32
  }
  func.func @transform_2(%arg0: i32, %arg1: i32) -> (i32, i32, i32) {
    %c0_i32 = arith.constant 0 : i32
    %c0_i32_0 = arith.constant 0 : i32
    return %arg1, %arg0, %c0_i32 : i32, i32, i32
  }
}

</mosaic_0001>

<llo_original>
// kernel: attention_rnn_decoder.1
$region0: #{attention_rnn_decoder.1}
  #allocation0 [shape = 'u32[]', space=smem, size = 0x4, offset = 0x4, fixed_abs, tag = 'smem constant byte address 0x4 - core index']
  #allocation1 [shape = 'u32[144,128]{1,0:T(1,128)}', space=vmem, size = 0x12000, scoped, tag = 'internal scratch']
  #allocation2 [shape = 'f32[2,32]{1,0:T(2,128)}', space=vmem, size = 0x400, scoped, tag = 'scratch operand']
  %s0 = inlined_call_operand.vmem [shape: f32[8,2,32], index: 0, kind: input, shape index: {}]
  %s1 = inlined_call_operand.vmem [shape: bf16[32,32], index: 1, kind: input, shape index: {}]
  %s2 = inlined_call_operand.vmem [shape: bf16[8,2,32], index: 2, kind: output, shape index: {}]
  %s3 = sld [smem:[#allocation0]]
  $region22: #{attention_rnn_decoder.1} parent=0
    _
  %s5 = ssub.s32 1, %s3
  %s6 = scalar_select 0, %s5, %s3
  // Predicated region
  $region2: #{attention_rnn_decoder.1} parent=0 // pred_check
    _
  $region3: #{attention_rnn_decoder.1} parent=0 // pred_check_branch
    %8 = sbr.rel (0) target = $region5
  $region4: #{attention_rnn_decoder.1} parent=0 // pred_region
    _
  $region5: #{attention_rnn_decoder.1} parent=0 // pred_fallthru
    _
  // Predicated region
  $region6: #{attention_rnn_decoder.1} parent=0 // pred_check
    _
  $region7: #{attention_rnn_decoder.1} parent=0 // pred_check_branch
    %10 = sbr.rel (0) target = $region9
  $region8: #{attention_rnn_decoder.1} parent=0 // pred_region
    _
  $region9: #{attention_rnn_decoder.1} parent=0 // pred_fallthru
    _
  %p12 = scmp.eq.s32.totalorder 0, 0
  // Predicated region
  $region10: #{attention_rnn_decoder.1} parent=0 // pred_check
    %p13 = pneg %p12
  $region11: #{attention_rnn_decoder.1} parent=0 // pred_check_branch
    %15 = sbr.rel (%p13) target = $region13
  $region12: #{attention_rnn_decoder.1} parent=0 // pred_region
    %vm16 = vcmask 254976
    %17 = vst.msk [vmem:[#allocation2] sm:$0x3] %vm16, 0.0
  $region13: #{attention_rnn_decoder.1} parent=0 // pred_fallthru
    _
  %v18 = vld [vmem:[%s1] sm:$0xf]
  %v19 = vld [vmem:[%s1 + $0x4] sm:$0xf]
  %v20 = vld [vmem:[%s1 + $0x8] sm:$0xf]
  %v21 = vld [vmem:[%s1 + $0xc] sm:$0xf]
  %v22 = vld [vmem:[#allocation2] sm:$0x3]
  %v23 = vld [vmem:[%s0] sm:$0x3]
  %v24 = vpack.c.bf16 %v22, %v22
  %v29 = vunpack.c.l.b16 %v18
  %v30 = vunpack.c.l.b16 %v19
  %v31 = vunpack.c.l.b16 %v20
  %v32 = vunpack.c.l.b16 %v21
  %v33 = vpack.c.b16 %v30, %v29
  %v34 = vpack.c.b16 %v32, %v31
  %vm37 = vcmask 261120
  %v39 = vsel %vm37, %v24, 0
  %41 = vmatprep.subr.bf16.mxu0 0
  %42 = vmatpush1.bf16.msra.mxu0 %v33
  %43 = vmatprep.subr.bf16.mxu0 0
  %44 = vmatpush1.bf16.msra.mxu0 %v34
  %45 = vmatprep.subr.bf16.mxu0 0
  %46 = vmatpush1.bf16.msra.mxu0 0
  %47 = vmatprep.subr.bf16.mxu0 0
  %48 = vmatpush1.bf16.msra.mxu0 0
  %49 = vmatprep.subr.bf16.mxu0 0
  %50 = vmatpush1.bf16.msra.mxu0 0
  %51 = vmatprep.subr.bf16.mxu0 0
  %52 = vmatpush1.bf16.msra.mxu0 0
  %53 = vmatprep.subr.bf16.mxu0 0
  %54 = vmatpush1.bf16.msra.mxu0 0
  %55 = vmatprep.subr.bf16.mxu0 0
  %56 = vmatpush1.bf16.msra.mxu0 0
  %57 = vmatprep.subr.bf16.mxu0 0
  %58 = vmatpush1.bf16.msra.mxu0 0
  %59 = vmatprep.subr.bf16.mxu0 0
  %60 = vmatpush1.bf16.msra.mxu0 0
  %61 = vmatprep.subr.bf16.mxu0 0
  %62 = vmatpush1.bf16.msra.mxu0 0
  %63 = vmatprep.subr.bf16.mxu0 0
  %64 = vmatpush1.bf16.msra.mxu0 0
  %65 = vmatprep.subr.bf16.mxu0 0
  %66 = vmatpush1.bf16.msra.mxu0 0
  %67 = vmatprep.subr.bf16.mxu0 0
  %68 = vmatpush1.bf16.msra.mxu0 0
  %69 = vmatprep.subr.bf16.mxu0 0
  %70 = vmatpush1.bf16.msra.mxu0 0
  %71 = vmatprep.subr.bf16.mxu0 0
  %72 = vmatpush1.bf16.msra.mxu0 0
  %73 = vmatprep.mubr.bf16.mxu0 0
  %74 = vmatmul.mubr.bf16.gmra.mrb[0].mxu0 %v39
  %v75 = vpop.f32.mrb[0].mxu0
  %v76 = vadd.f32 0.0, %v75
  %v77 = vpop.f32.mrb[0].mxu0
  %v78 = vpop.f32.mrb[0].mxu0
  %v79 = vpop.f32.mrb[0].mxu0
  %80 = vdwg.mxu0
  %v81 = vadd.f32 %v23, %v76
  %v82 = vtanh.pop %v81
  %v83 = vpack.c.bf16 %v82, %v82
  %vm84 = vcmask 253952
  %85 = vst.msk [vmem:[%s2] sm:$0x1] %vm84, %v83
  %s86 = scalar_lea.vmem %s0, 2
  %v87 = vld [vmem:[%s86] sm:$0x3]
  %v89 = vsel %vm37, %v83, 0
  %91 = vmatprep.subr.bf16.mxu0 0
  %92 = vmatpush1.bf16.msra.mxu0 %v33
  %93 = vmatprep.subr.bf16.mxu0 0
  %94 = vmatpush1.bf16.msra.mxu0 %v34
  %95 = vmatprep.subr.bf16.mxu0 0
  %96 = vmatpush1.bf16.msra.mxu0 0
  %97 = vmatprep.subr.bf16.mxu0 0
  %98 = vmatpush1.bf16.msra.mxu0 0
  %99 = vmatprep.subr.bf16.mxu0 0
  %100 = vmatpush1.bf16.msra.mxu0 0
  %101 = vmatprep.subr.bf16.mxu0 0
  %102 = vmatpush1.bf16.msra.mxu0 0
  %103 = vmatprep.subr.bf16.mxu0 0
  %104 = vmatpush1.bf16.msra.mxu0 0
  %105 = vmatprep.subr.bf16.mxu0 0
  %106 = vmatpush1.bf16.msra.mxu0 0
  %107 = vmatprep.subr.bf16.mxu0 0
  %108 = vmatpush1.bf16.msra.mxu0 0
  %109 = vmatprep.subr.bf16.mxu0 0
  %110 = vmatpush1.bf16.msra.mxu0 0
  %111 = vmatprep.subr.bf16.mxu0 0
  %112 = vmatpush1.bf16.msra.mxu0 0
  %113 = vmatprep.subr.bf16.mxu0 0
  %114 = vmatpush1.bf16.msra.mxu0 0
  %115 = vmatprep.subr.bf16.mxu0 0
  %116 = vmatpush1.bf16.msra.mxu0 0
  %117 = vmatprep.subr.bf16.mxu0 0
  %118 = vmatpush1.bf16.msra.mxu0 0
  %119 = vmatprep.subr.bf16.mxu0 0
  %120 = vmatpush1.bf16.msra.mxu0 0
  %121 = vmatprep.subr.bf16.mxu0 0
  %122 = vmatpush1.bf16.msra.mxu0 0
  %123 = vmatprep.mubr.bf16.mxu0 0
  %124 = vmatmul.mubr.bf16.gmra.mrb[0].mxu0 %v89
  %v125 = vpop.f32.mrb[0].mxu0
  %v126 = vadd.f32 0.0, %v125
  %v127 = vpop.f32.mrb[0].mxu0
  %v128 = vpop.f32.mrb[0].mxu0
  %v129 = vpop.f32.mrb[0].mxu0
  %130 = vdwg.mxu0
  %v131 = vadd.f32 %v87, %v126
  %v132 = vtanh.pop %v131
  %v133 = vpack.c.bf16 %v132, %v132
  %s134 = scalar_lea.vmem %s2, 1
  %135 = vst.msk [vmem:[%s134] sm:$0x1] %vm84, %v133
  %s136 = scalar_lea.vmem %s0, 4
  %v137 = vld [vmem:[%s136] sm:$0x3]
  %v139 = vsel %vm37, %v133, 0
  %141 = vmatprep.subr.bf16.mxu0 0
  %142 = vmatpush1.bf16.msra.mxu0 %v33
  %143 = vmatprep.subr.bf16.mxu0 0
  %144 = vmatpush1.bf16.msra.mxu0 %v34
  %145 = vmatprep.subr.bf16.mxu0 0
  %146 = vmatpush1.bf16.msra.mxu0 0
  %147 = vmatprep.subr.bf16.mxu0 0
  %148 = vmatpush1.bf16.msra.mxu0 0
  %149 = vmatprep.subr.bf16.mxu0 0
  %150 = vmatpush1.bf16.msra.mxu0 0
  %151 = vmatprep.subr.bf16.mxu0 0
  %152 = vmatpush1.bf16.msra.mxu0 0
  %153 = vmatprep.subr.bf16.mxu0 0
  %154 = vmatpush1.bf16.msra.mxu0 0
  %155 = vmatprep.subr.bf16.mxu0 0
  %156 = vmatpush1.bf16.msra.mxu0 0
  %157 = vmatprep.subr.bf16.mxu0 0
  %158 = vmatpush1.bf16.msra.mxu0 0
  %159 = vmatprep.subr.bf16.mxu0 0
  %160 = vmatpush1.bf16.msra.mxu0 0
  %161 = vmatprep.subr.bf16.mxu0 0
  %162 = vmatpush1.bf16.msra.mxu0 0
  %163 = vmatprep.subr.bf16.mxu0 0
  %164 = vmatpush1.bf16.msra.mxu0 0
  %165 = vmatprep.subr.bf16.mxu0 0
  %166 = vmatpush1.bf16.msra.mxu0 0
  %167 = vmatprep.subr.bf16.mxu0 0
  %168 = vmatpush1.bf16.msra.mxu0 0
  %169 = vmatprep.subr.bf16.mxu0 0
  %170 = vmatpush1.bf16.msra.mxu0 0
  %171 = vmatprep.subr.bf16.mxu0 0
  %172 = vmatpush1.bf16.msra.mxu0 0
  %173 = vmatprep.mubr.bf16.mxu0 0
  %174 = vmatmul.mubr.bf16.gmra.mrb[0].mxu0 %v139
  %v175 = vpop.f32.mrb[0].mxu0
  %v176 = vadd.f32 0.0, %v175
  %v177 = vpop.f32.mrb[0].mxu0
  %v178 = vpop.f32.mrb[0].mxu0
  %v179 = vpop.f32.mrb[0].mxu0
  %180 = vdwg.mxu0
  %v181 = vadd.f32 %v137, %v176
  %v182 = vtanh.pop %v181
  %v183 = vpack.c.bf16 %v182, %v182
  %s184 = scalar_lea.vmem %s2, 2
  %185 = vst.msk [vmem:[%s184] sm:$0x1] %vm84, %v183
  %s186 = scalar_lea.vmem %s0, 6
  %v187 = vld [vmem:[%s186] sm:$0x3]
  %v189 = vsel %vm37, %v183, 0
  %191 = vmatprep.subr.bf16.mxu0 0
  %192 = vmatpush1.bf16.msra.mxu0 %v33
  %193 = vmatprep.subr.bf16.mxu0 0
  %194 = vmatpush1.bf16.msra.mxu0 %v34
  %195 = vmatprep.subr.bf16.mxu0 0
  %196 = vmatpush1.bf16.msra.mxu0 0
  %197 = vmatprep.subr.bf16.mxu0 0
  %198 = vmatpush1.bf16.msra.mxu0 0
  %199 = vmatprep.subr.bf16.mxu0 0
  %200 = vmatpush1.bf16.msra.mxu0 0
  %201 = vmatprep.subr.bf16.mxu0 0
  %202 = vmatpush1.bf16.msra.mxu0 0
  %203 = vmatprep.subr.bf16.mxu0 0
  %204 = vmatpush1.bf16.msra.mxu0 0
  %205 = vmatprep.subr.bf16.mxu0 0
  %206 = vmatpush1.bf16.msra.mxu0 0
  %207 = vmatprep.subr.bf16.mxu0 0
  %208 = vmatpush1.bf16.msra.mxu0 0
  %209 = vmatprep.subr.bf16.mxu0 0
  %210 = vmatpush1.bf16.msra.mxu0 0
  %211 = vmatprep.subr.bf16.mxu0 0
  %212 = vmatpush1.bf16.msra.mxu0 0
  %213 = vmatprep.subr.bf16.mxu0 0
  %214 = vmatpush1.bf16.msra.mxu0 0
  %215 = vmatprep.subr.bf16.mxu0 0
  %216 = vmatpush1.bf16.msra.mxu0 0
  %217 = vmatprep.subr.bf16.mxu0 0
  %218 = vmatpush1.bf16.msra.mxu0 0
  %219 = vmatprep.subr.bf16.mxu0 0
  %220 = vmatpush1.bf16.msra.mxu0 0
  %221 = vmatprep.subr.bf16.mxu0 0
  %222 = vmatpush1.bf16.msra.mxu0 0
  %223 = vmatprep.mubr.bf16.mxu0 0
  %224 = vmatmul.mubr.bf16.gmra.mrb[0].mxu0 %v189
  %v225 = vpop.f32.mrb[0].mxu0
  %v226 = vadd.f32 0.0, %v225
  %v227 = vpop.f32.mrb[0].mxu0
  %v228 = vpop.f32.mrb[0].mxu0
  %v229 = vpop.f32.mrb[0].mxu0
  %230 = vdwg.mxu0
  %v231 = vadd.f32 %v187, %v226
  %v232 = vtanh.pop %v231
  %v233 = vpack.c.bf16 %v232, %v232
  %s234 = scalar_lea.vmem %s2, 3
  %235 = vst.msk [vmem:[%s234] sm:$0x1] %vm84, %v233
  %s236 = scalar_lea.vmem %s0, 8
  %v237 = vld [vmem:[%s236] sm:$0x3]
  %v239 = vsel %vm37, %v233, 0
  %241 = vmatprep.subr.bf16.mxu0 0
  %242 = vmatpush1.bf16.msra.mxu0 %v33
  %243 = vmatprep.subr.bf16.mxu0 0
  %244 = vmatpush1.bf16.msra.mxu0 %v34
  %245 = vmatprep.subr.bf16.mxu0 0
  %246 = vmatpush1.bf16.msra.mxu0 0
  %247 = vmatprep.subr.bf16.mxu0 0
  %248 = vmatpush1.bf16.msra.mxu0 0
  %249 = vmatprep.subr.bf16.mxu0 0
  %250 = vmatpush1.bf16.msra.mxu0 0
  %251 = vmatprep.subr.bf16.mxu0 0
  %252 = vmatpush1.bf16.msra.mxu0 0
  %253 = vmatprep.subr.bf16.mxu0 0
  %254 = vmatpush1.bf16.msra.mxu0 0
  %255 = vmatprep.subr.bf16.mxu0 0
  %256 = vmatpush1.bf16.msra.mxu0 0
  %257 = vmatprep.subr.bf16.mxu0 0
  %258 = vmatpush1.bf16.msra.mxu0 0
  %259 = vmatprep.subr.bf16.mxu0 0
  %260 = vmatpush1.bf16.msra.mxu0 0
  %261 = vmatprep.subr.bf16.mxu0 0
  %262 = vmatpush1.bf16.msra.mxu0 0
  %263 = vmatprep.subr.bf16.mxu0 0
  %264 = vmatpush1.bf16.msra.mxu0 0
  %265 = vmatprep.subr.bf16.mxu0 0
  %266 = vmatpush1.bf16.msra.mxu0 0
  %267 = vmatprep.subr.bf16.mxu0 0
  %268 = vmatpush1.bf16.msra.mxu0 0
  %269 = vmatprep.subr.bf16.mxu0 0
  %270 = vmatpush1.bf16.msra.mxu0 0
  %271 = vmatprep.subr.bf16.mxu0 0
  %272 = vmatpush1.bf16.msra.mxu0 0
  %273 = vmatprep.mubr.bf16.mxu0 0
  %274 = vmatmul.mubr.bf16.gmra.mrb[0].mxu0 %v239
  %v275 = vpop.f32.mrb[0].mxu0
  %v276 = vadd.f32 0.0, %v275
  %v277 = vpop.f32.mrb[0].mxu0
  %v278 = vpop.f32.mrb[0].mxu0
  %v279 = vpop.f32.mrb[0].mxu0
  %280 = vdwg.mxu0
  %v281 = vadd.f32 %v237, %v276
  %v282 = vtanh.pop %v281
  %v283 = vpack.c.bf16 %v282, %v282
  %s284 = scalar_lea.vmem %s2, 4
  %285 = vst.msk [vmem:[%s284] sm:$0x1] %vm84, %v283
  %s286 = scalar_lea.vmem %s0, 10
  %v287 = vld [vmem:[%s286] sm:$0x3]
  %v289 = vsel %vm37, %v283, 0
  %291 = vmatprep.subr.bf16.mxu0 0
  %292 = vmatpush1.bf16.msra.mxu0 %v33
  %293 = vmatprep.subr.bf16.mxu0 0
  %294 = vmatpush1.bf16.msra.mxu0 %v34
  %295 = vmatprep.subr.bf16.mxu0 0
  %296 = vmatpush1.bf16.msra.mxu0 0
  %297 = vmatprep.subr.bf16.mxu0 0
  %298 = vmatpush1.bf16.msra.mxu0 0
  %299 = vmatprep.subr.bf16.mxu0 0
  %300 = vmatpush1.bf16.msra.mxu0 0
  %301 = vmatprep.subr.bf16.mxu0 0
  %302 = vmatpush1.bf16.msra.mxu0 0
  %303 = vmatprep.subr.bf16.mxu0 0
  %304 = vmatpush1.bf16.msra.mxu0 0
  %305 = vmatprep.subr.bf16.mxu0 0
  %306 = vmatpush1.bf16.msra.mxu0 0
  %307 = vmatprep.subr.bf16.mxu0 0
  %308 = vmatpush1.bf16.msra.mxu0 0
  %309 = vmatprep.subr.bf16.mxu0 0
  %310 = vmatpush1.bf16.msra.mxu0 0
  %311 = vmatprep.subr.bf16.mxu0 0
  %312 = vmatpush1.bf16.msra.mxu0 0
  %313 = vmatprep.subr.bf16.mxu0 0
  %314 = vmatpush1.bf16.msra.mxu0 0
  %315 = vmatprep.subr.bf16.mxu0 0
  %316 = vmatpush1.bf16.msra.mxu0 0
  %317 = vmatprep.subr.bf16.mxu0 0
  %318 = vmatpush1.bf16.msra.mxu0 0
  %319 = vmatprep.subr.bf16.mxu0 0
  %320 = vmatpush1.bf16.msra.mxu0 0
  %321 = vmatprep.subr.bf16.mxu0 0
  %322 = vmatpush1.bf16.msra.mxu0 0
  %323 = vmatprep.mubr.bf16.mxu0 0
  %324 = vmatmul.mubr.bf16.gmra.mrb[0].mxu0 %v289
  %v325 = vpop.f32.mrb[0].mxu0
  %v326 = vadd.f32 0.0, %v325
  %v327 = vpop.f32.mrb[0].mxu0
  %v328 = vpop.f32.mrb[0].mxu0
  %v329 = vpop.f32.mrb[0].mxu0
  %330 = vdwg.mxu0
  %v331 = vadd.f32 %v287, %v326
  %v332 = vtanh.pop %v331
  %v333 = vpack.c.bf16 %v332, %v332
  %s334 = scalar_lea.vmem %s2, 5
  %335 = vst.msk [vmem:[%s334] sm:$0x1] %vm84, %v333
  %s336 = scalar_lea.vmem %s0, 12
  %v337 = vld [vmem:[%s336] sm:$0x3]
  %v339 = vsel %vm37, %v333, 0
  %341 = vmatprep.subr.bf16.mxu0 0
  %342 = vmatpush1.bf16.msra.mxu0 %v33
  %343 = vmatprep.subr.bf16.mxu0 0
  %344 = vmatpush1.bf16.msra.mxu0 %v34
  %345 = vmatprep.subr.bf16.mxu0 0
  %346 = vmatpush1.bf16.msra.mxu0 0
  %347 = vmatprep.subr.bf16.mxu0 0
  %348 = vmatpush1.bf16.msra.mxu0 0
  %349 = vmatprep.subr.bf16.mxu0 0
  %350 = vmatpush1.bf16.msra.mxu0 0
  %351 = vmatprep.subr.bf16.mxu0 0
  %352 = vmatpush1.bf16.msra.mxu0 0
  %353 = vmatprep.subr.bf16.mxu0 0
  %354 = vmatpush1.bf16.msra.mxu0 0
  %355 = vmatprep.subr.bf16.mxu0 0
  %356 = vmatpush1.bf16.msra.mxu0 0
  %357 = vmatprep.subr.bf16.mxu0 0
  %358 = vmatpush1.bf16.msra.mxu0 0
  %359 = vmatprep.subr.bf16.mxu0 0
  %360 = vmatpush1.bf16.msra.mxu0 0
  %361 = vmatprep.subr.bf16.mxu0 0
  %362 = vmatpush1.bf16.msra.mxu0 0
  %363 = vmatprep.subr.bf16.mxu0 0
  %364 = vmatpush1.bf16.msra.mxu0 0
  %365 = vmatprep.subr.bf16.mxu0 0
  %366 = vmatpush1.bf16.msra.mxu0 0
  %367 = vmatprep.subr.bf16.mxu0 0
  %368 = vmatpush1.bf16.msra.mxu0 0
  %369 = vmatprep.subr.bf16.mxu0 0
  %370 = vmatpush1.bf16.msra.mxu0 0
  %371 = vmatprep.subr.bf16.mxu0 0
  %372 = vmatpush1.bf16.msra.mxu0 0
  %373 = vmatprep.mubr.bf16.mxu0 0
  %374 = vmatmul.mubr.bf16.gmra.mrb[0].mxu0 %v339
  %v375 = vpop.f32.mrb[0].mxu0
  %v376 = vadd.f32 0.0, %v375
  %v377 = vpop.f32.mrb[0].mxu0
  %v378 = vpop.f32.mrb[0].mxu0
  %v379 = vpop.f32.mrb[0].mxu0
  %380 = vdwg.mxu0
  %v381 = vadd.f32 %v337, %v376
  %v382 = vtanh.pop %v381
  %v383 = vpack.c.bf16 %v382, %v382
  %s384 = scalar_lea.vmem %s2, 6
  %385 = vst.msk [vmem:[%s384] sm:$0x1] %vm84, %v383
  %s386 = scalar_lea.vmem %s0, 14
  %v387 = vld [vmem:[%s386] sm:$0x3]
  %v389 = vsel %vm37, %v383, 0
  %391 = vmatprep.subr.bf16.mxu0 0
  %392 = vmatpush1.bf16.msra.mxu0 %v33
  %393 = vmatprep.subr.bf16.mxu0 0
  %394 = vmatpush1.bf16.msra.mxu0 %v34
  %395 = vmatprep.subr.bf16.mxu0 0
  %396 = vmatpush1.bf16.msra.mxu0 0
  %397 = vmatprep.subr.bf16.mxu0 0
  %398 = vmatpush1.bf16.msra.mxu0 0
  %399 = vmatprep.subr.bf16.mxu0 0
  %400 = vmatpush1.bf16.msra.mxu0 0
  %401 = vmatprep.subr.bf16.mxu0 0
  %402 = vmatpush1.bf16.msra.mxu0 0
  %403 = vmatprep.subr.bf16.mxu0 0
  %404 = vmatpush1.bf16.msra.mxu0 0
  %405 = vmatprep.subr.bf16.mxu0 0
  %406 = vmatpush1.bf16.msra.mxu0 0
  %407 = vmatprep.subr.bf16.mxu0 0
  %408 = vmatpush1.bf16.msra.mxu0 0
  %409 = vmatprep.subr.bf16.mxu0 0
  %410 = vmatpush1.bf16.msra.mxu0 0
  %411 = vmatprep.subr.bf16.mxu0 0
  %412 = vmatpush1.bf16.msra.mxu0 0
  %413 = vmatprep.subr.bf16.mxu0 0
  %414 = vmatpush1.bf16.msra.mxu0 0
  %415 = vmatprep.subr.bf16.mxu0 0
  %416 = vmatpush1.bf16.msra.mxu0 0
  %417 = vmatprep.subr.bf16.mxu0 0
  %418 = vmatpush1.bf16.msra.mxu0 0
  %419 = vmatprep.subr.bf16.mxu0 0
  %420 = vmatpush1.bf16.msra.mxu0 0
  %421 = vmatprep.subr.bf16.mxu0 0
  %422 = vmatpush1.bf16.msra.mxu0 0
  %423 = vmatprep.mubr.bf16.mxu0 0
  %424 = vmatmul.mubr.bf16.gmra.mrb[0].mxu0 %v389
  %v425 = vpop.f32.mrb[0].mxu0
  %v426 = vadd.f32 0.0, %v425
  %v427 = vpop.f32.mrb[0].mxu0
  %v428 = vpop.f32.mrb[0].mxu0
  %v429 = vpop.f32.mrb[0].mxu0
  %430 = vdwg.mxu0
  %v431 = vadd.f32 %v387, %v426
  %v432 = vtanh.pop %v431
  %v433 = vpack.c.bf16 %v432, %v432
  %s434 = scalar_lea.vmem %s2, 7
  %435 = vst.msk [vmem:[%s434] sm:$0x1] %vm84, %v433
  %vm436 = vcmask 254976
  %437 = vst.msk [vmem:[#allocation2] sm:$0x3] %vm436, %v432
  // Predicated region
  $region14: #{attention_rnn_decoder.1} parent=0 // pred_check
    _
  $region15: #{attention_rnn_decoder.1} parent=0 // pred_check_branch
    %439 = sbr.rel (0) target = $region17
  $region16: #{attention_rnn_decoder.1} parent=0 // pred_region
    _
  $region17: #{attention_rnn_decoder.1} parent=0 // pred_fallthru
    _
  // Predicated region
  $region18: #{attention_rnn_decoder.1} parent=0 // pred_check
    _
  $region19: #{attention_rnn_decoder.1} parent=0 // pred_check_branch
    %441 = sbr.rel (0) target = $region21
  $region20: #{attention_rnn_decoder.1} parent=0 // pred_region
    _
  $region21: #{attention_rnn_decoder.1} parent=0 // pred_fallthru
    _

</llo_original>
